<compile_context>
chip_gen: v7x
topology: tpu7x:2x2x1
jax: 0.10.0
libtpu: 0.0.40
codegen_flags: <defaults>
</compile_context>

<pallas_src>
import math

import jax
import jax.numpy as jnp
from jax.experimental import pallas as pl
from jax.experimental.pallas import tpu as pltpu


def _h_sigmoid_kernel(x_ref, o_ref):
    x = x_ref[...]
    # relu6(x + 3) / 6  ==  clip(x + 3, 0, 6) * (1/6)   (VPU-only, no EUP/XLU)
    y = jnp.clip(x + 3.0, 0.0, 6.0) * (1.0 / 6.0)
    o_ref[...] = y.astype(o_ref.dtype)


def h_sigmoid_pallas(x, *, lane_width=512, block_rows=512):
    """Apply h_sigmoid elementwise via a lane-dense, batch-tiled Pallas kernel."""
    orig_shape = x.shape
    dtype = x.dtype
    total = math.prod(orig_shape)

    # Lane-dense last dim: a multiple of 128 (512 preferred, 128 for tiny inputs).
    lane_w = lane_width if total >= lane_width else 128
    rows = pl.cdiv(total, lane_w)
    rows_padded = pl.cdiv(rows, 8) * 8          # sublane multiple of 8
    padded_total = rows_padded * lane_w

    x_flat = x.reshape(-1)
    if padded_total != total:
        x_flat = jnp.pad(x_flat, (0, padded_total - total))
    x2d = x_flat.reshape(rows_padded, lane_w)

    brows = min(block_rows, rows_padded)        # (brows, lane_w) satisfies (8,128)
    grid = (pl.cdiv(rows_padded, brows),)

    itemsize = jnp.dtype(dtype).itemsize
    out2d = pl.pallas_call(
        _h_sigmoid_kernel,
        out_shape=jax.ShapeDtypeStruct((rows_padded, lane_w), dtype),
        grid=grid,
        in_specs=[pl.BlockSpec((brows, lane_w), lambda i: (i, 0))],
        out_specs=pl.BlockSpec((brows, lane_w), lambda i: (i, 0)),
        compiler_params=pltpu.CompilerParams(
            dimension_semantics=("parallel",),
        ),
        cost_estimate=pl.CostEstimate(
            flops=3 * padded_total,
            transcendentals=0,
            bytes_accessed=2 * padded_total * itemsize,
        ),
    )(x2d)

    return out2d.reshape(-1)[:total].reshape(orig_shape)


class h_sigmoid:
    """JAX/Pallas equivalent of the PyTorch h_sigmoid module."""

    def __init__(self, inplace=True):
        del inplace  # functional JAX: in-place flag has no effect

    def __call__(self, x):
        return h_sigmoid_pallas(x)


if __name__ == "__main__":
    key = jax.random.PRNGKey(0)
    # NCHW input; scale so values span both clamp regions of relu6(x+3).
    x = jax.random.normal(key, (2, 4, 16, 16), dtype=jnp.float32) * 4.0

    module = h_sigmoid()
    out = jax.block_until_ready(module(x))

    ref = jnp.clip(x + 3.0, 0.0, 6.0) / 6.0
    assert out.shape == ref.shape == (2, 4, 16, 16)
    assert out.dtype == ref.dtype
    assert bool(jnp.allclose(out, ref, atol=1e-6, rtol=1e-6))

    print("KERNEL_OK")
</pallas_src>

<mosaic_0001>
module attributes {stable_mosaic.version = 11 : i64} {
  func.func @_h_sigmoid_kernel(%arg0: i32, %arg1: memref<8x512xf32, #tpu.memory_space<vmem>>, %arg2: memref<8x512xf32, #tpu.memory_space<vmem>>) attributes {dimension_semantics = [#tpu.dimension_semantics<parallel>], iteration_bounds = array<i64: 1>, scalar_prefetch = 0 : i64, scratch_operands = 0 : i64, tpu.core_type = #tpu.core_type<tc>, window_params = [{transform_indices = @transform_0, window_bounds = array<i64: 8, 512>}, {transform_indices = @transform_1, window_bounds = array<i64: 8, 512>}]} {
    %c0 = arith.constant 0 : index
    %c0_0 = arith.constant 0 : index
    %0 = vector.load %arg1[%c0, %c0_0] : memref<8x512xf32, #tpu.memory_space<vmem>>, vector<8x512xf32>
    %cst = arith.constant 3.000000e+00 : f32
    %1 = vector.broadcast %cst : f32 to vector<8x512xf32>
    %2 = arith.addf %0, %1 : vector<8x512xf32>
    %cst_1 = arith.constant 0.000000e+00 : f32
    %cst_2 = arith.constant 6.000000e+00 : f32
    %3 = vector.broadcast %cst_1 : f32 to vector<8x512xf32>
    %4 = arith.maximumf %3, %2 : vector<8x512xf32>
    %5 = vector.broadcast %cst_2 : f32 to vector<8x512xf32>
    %6 = arith.minimumf %5, %4 : vector<8x512xf32>
    %cst_3 = arith.constant 0.166666672 : f32
    %7 = vector.broadcast %cst_3 : f32 to vector<8x512xf32>
    %8 = arith.mulf %6, %7 : vector<8x512xf32>
    %c0_4 = arith.constant 0 : index
    %c0_5 = arith.constant 0 : index
    %9 = vector.load %arg2[%c0_4, %c0_5] : memref<8x512xf32, #tpu.memory_space<vmem>>, vector<8x512xf32>
    tpu.vector_store %arg2[%c0_4, %c0_5], %8 {strides = array<i32>} : memref<8x512xf32, #tpu.memory_space<vmem>>, vector<8x512xf32>,
    return
  }
  func.func @transform_0(%arg0: i32) -> (i32, i32) {
    %c0_i32 = arith.constant 0 : i32
    %c0_i32_0 = arith.constant 0 : i32
    return %arg0, %c0_i32 : i32, i32
  }
  func.func @transform_1(%arg0: i32) -> (i32, i32) {
    %c0_i32 = arith.constant 0 : i32
    %c0_i32_0 = arith.constant 0 : i32
    return %arg0, %c0_i32 : i32, i32
  }
}

</mosaic_0001>

<llo_original>
// kernel: tpu_custom_call.1
$region0: #{tpu_custom_call.1}
  #allocation0 [shape = 'u32[]', space=smem, size = 0x4, offset = 0x4, fixed_abs, tag = 'smem constant byte address 0x4 - core index']
  #allocation1 [shape = 'u32[144,128]{1,0:T(1,128)}', space=vmem, size = 0x12000, scoped, tag = 'internal scratch']
  %s0 = inlined_call_operand.hbm [shape: f32[8,512], index: 0, kind: input, shape index: {}]
  %s1 = inlined_call_operand.hbm [shape: f32[8,512], index: 1, kind: output, shape index: {}]
  %s2 = sld [smem:[#allocation0]]
  $region18: #{tpu_custom_call.1} parent=0
    _
  %s4 = ssub.s32 1, %s2
  %s5 = scalar_select 0, %s4, %s2
  $region1: #{tpu_custom_call.1} parent=0
    #allocation2 [shape = 'u8[16384]{0}', space=vmem, size = 0x4000, scoped, tag = 'input window, operand 0, single buffered']
    #allocation3 [shape = 's32[1]{0}', space=sflag, size = 0x4, scoped, tag = 'scoped memory for tpu_custom_call.1']
    #allocation4 [shape = 's32[1]{0}', space=sflag, size = 0x4, scoped, tag = 'scoped memory for tpu_custom_call.1']
    #allocation5 [shape = 'u8[16384]{0}', space=vmem, size = 0x4000, scoped, tag = 'output window, operand 0, single buffered']
    %6 = vsyncpa [#allocation3], 0
    %7 = vsyncpa [#allocation4], 0
    // Predicated region
    $region2: #{tpu_custom_call.1} parent=1 // pred_check
      _
    $region3: #{tpu_custom_call.1} parent=1 // pred_check_branch
      %9 = sbr.rel (0) target = $region5
    $region4: #{tpu_custom_call.1} parent=1 // pred_region
      %s11 = ssub.s32 512, 512
      %12 = vsyncadd [#allocation3], %s11
      %s14 = sshll.u32 [#allocation2], 4
      %s15 = int_to_ptr.vmem [resolvable:$true] %s14
      %17 = dma.hbm_to_vmem [thread:$0]  %s0, 512, %s15, [#allocation3]
    $region5: #{tpu_custom_call.1} parent=1 // pred_fallthru
      _
    // Predicated region
    $region6: #{tpu_custom_call.1} parent=1 // pred_check
      _
    $region7: #{tpu_custom_call.1} parent=1 // pred_check_branch
      %19 = sbr.rel (0) target = $region9
    $region8: #{tpu_custom_call.1} parent=1 // pred_region
      %20 = dma.done [#allocation3], 512
    $region9: #{tpu_custom_call.1} parent=1 // pred_fallthru
      _
    %v21 = vld [vmem:[#allocation2] sm:$0xff]
    %v22 = vld [vmem:[#allocation2 + $0x8] sm:$0xff]
    %v23 = vld [vmem:[#allocation2 + $0x10] sm:$0xff]
    %v24 = vld [vmem:[#allocation2 + $0x18] sm:$0xff]
    %v25 = vadd.f32 %v21, 3.0
    %v26 = vadd.f32 %v22, 3.0
    %v27 = vadd.f32 %v23, 3.0
    %v28 = vadd.f32 %v24, 3.0
    %v29 = vmax.f32 %v25, 0.0
    %v30 = vmax.f32 %v26, 0.0
    %v31 = vmax.f32 %v27, 0.0
    %v32 = vmax.f32 %v28, 0.0
    %v33 = vmin.f32 %v29, 6.0
    %v34 = vmin.f32 %v30, 6.0
    %v35 = vmin.f32 %v31, 6.0
    %v36 = vmin.f32 %v32, 6.0
    %v37 = vmul.f32 %v33, 0.16666667
    %v38 = vmul.f32 %v34, 0.16666667
    %v39 = vmul.f32 %v35, 0.16666667
    %v40 = vmul.f32 %v36, 0.16666667
    %41 = vst [vmem:[#allocation5] sm:$0xff] %v37
    %42 = vst [vmem:[#allocation5 + $0x8] sm:$0xff] %v38
    %43 = vst [vmem:[#allocation5 + $0x10] sm:$0xff] %v39
    %44 = vst [vmem:[#allocation5 + $0x18] sm:$0xff] %v40
    // Predicated region
    $region10: #{tpu_custom_call.1} parent=1 // pred_check
      _
    $region11: #{tpu_custom_call.1} parent=1 // pred_check_branch
      %46 = sbr.rel (0) target = $region13
    $region12: #{tpu_custom_call.1} parent=1 // pred_region
      %s48 = ssub.s32 512, 512
      %49 = vsyncadd [#allocation4], %s48
      %s51 = sshll.u32 [#allocation5], 4
      %s52 = int_to_ptr.vmem [resolvable:$true] %s51
      %54 = dma.vmem_to_hbm [thread:$0]  %s52, 512, %s1, [#allocation4]
    $region13: #{tpu_custom_call.1} parent=1 // pred_fallthru
      _
    // Predicated region
    $region14: #{tpu_custom_call.1} parent=1 // pred_check
      _
    $region15: #{tpu_custom_call.1} parent=1 // pred_check_branch
      %56 = sbr.rel (0) target = $region17
    $region16: #{tpu_custom_call.1} parent=1 // pred_region
      %57 = dma.done [#allocation4], 512
    $region17: #{tpu_custom_call.1} parent=1 // pred_fallthru
      _
    %58 = vsyncpa [#allocation3], 1
    %59 = vsyncpa [#allocation4], 1

</llo_original>
